<compile_context>
chip_gen: v7x
topology: tpu7x:2x2x1
jax: 0.10.0
libtpu: 0.0.40
codegen_flags: <defaults>
</compile_context>

<pallas_src>
import jax
import jax.numpy as jnp
from jax import lax
from jax.experimental import pallas as pl
from jax.experimental.pallas import tpu as pltpu

HIDDEN = 128
LANE = 128
SUBLANE = 8

# VMEM per batch row (f32): x block lane-padded to 128 lanes (512 B, double
# buffered) + h1/h2/out^T intermediates (~1.5 KiB) + out^T writeback (32 B,
# double buffered) ~= 2.6 KiB/row. MAX_TILE_B = 2048 -> ~5.5 MiB, comfortably
# under v5e's 16 MiB scoped default, v6e/v7x's 32 MiB default and v7x's 64 MiB
# physical VMEM. Raise vmem_limit_bytes in CompilerParams before going bigger.
MAX_TILE_B = 2048


def _dqn_kernel(x_ref, w1_ref, b1_ref, w2_ref, b2_ref, w3t_ref, b3t_ref, o_ref):
    x = x_ref[...].astype(jnp.float32)       # (tile_b, n_obs)
    w1 = w1_ref[...].astype(jnp.float32)     # (n_obs, HIDDEN)
    n_obs = x.shape[1]

    # Layer 1 on the VPU: K = n_obs (4 for CartPole) is far too small for the
    # MXU (contraction padded to 128/256 internally + fill/drain + MRF pop for
    # a trivial product). Unrolled broadcast-FMAs instead.
    acc = x[:, 0:1] * w1[0:1, :]
    for k in range(1, n_obs):
        acc = acc + x[:, k:k + 1] * w1[k:k + 1, :]
    h1 = jnp.maximum(acc + b1_ref[...], 0.0)                      # (tile_b, 128) f32

    # Layer 2: 128x128 MXU matmul (bf16 fast path on v6e/v7x), f32 accumulation,
    # f32 bias + ReLU epilogue. HIDDEN=128 underfills the 256-wide v6e/v7x MXU,
    # but total FLOPs are negligible — the kernel is DMA/overhead bound.
    h2 = jnp.dot(h1.astype(w2_ref.dtype), w2_ref[...],
                 preferred_element_type=jnp.float32)
    h2 = jnp.maximum(h2 + b2_ref[...], 0.0)                       # (tile_b, 128) f32

    # Layer 3, feature-major: out^T = w3t @ h2^T with w3t = [n_act_pad, 128]
    # (PyTorch [out, in] layout, sublane-padded). Output block (8, tile_b) is
    # lane-dense along the batch -> full unmasked stores, 16x less HBM
    # writeback than lane-padding the action dim to 128.
    out_t = lax.dot_general(
        w3t_ref[...], h2.astype(w3t_ref.dtype),
        dimension_numbers=(((1,), (1,)), ((), ())),
        preferred_element_type=jnp.float32)                       # (8, tile_b)
    o_ref[...] = (out_t + b3t_ref[...]).astype(o_ref.dtype)


def _device_kind():
    try:
        return jax.devices()[0].device_kind.lower()
    except Exception:
        return ""


def _resident_spec(shape):
    # Constant index_map -> DMA'd once; single buffer reclaims the dead copy.
    return pl.BlockSpec(shape, lambda i: (0, 0), pipeline_mode=pl.Buffered(1))


def dqn_forward(x, params, *, tile_b=None, compute_dtype=None):
    """x: [B, n_observations]. params: dict of w1,b1,w2,b2,w3,b3 (f32, [in,out]).

    tile_b=None        -> one batch tile per TensorCore (whole padded batch on
                          single-TC v5e/v6e, split across the 2 TCs on v7x),
                          capped at MAX_TILE_B against the scoped VMEM budget.
    compute_dtype=None -> bf16 for the MXU layers on v6e/v7x, f32 elsewhere.
                          Accumulation and the bias/ReLU epilogue are always f32.
    """
    w1, b1 = params["w1"], params["b1"]
    w2, b2 = params["w2"], params["b2"]
    w3, b3 = params["w3"], params["b3"]
    B, n_obs = x.shape
    n_actions = w3.shape[1]

    kind = _device_kind()
    num_tc = 2 if "v7" in kind else 1            # v7x: 2 TensorCores per chip
    if compute_dtype is None:
        compute_dtype = (jnp.bfloat16 if ("v6" in kind or "v7" in kind)
                         else jnp.float32)

    # ---- batch tiling: granularity 128 (f32 & bf16 sublane packing, and the
    # lane dim of the transposed output block); one tile per TC by default ----
    if tile_b is None:
        tile_b = -(-B // num_tc)
    tile_b = max(LANE, min(int(tile_b), MAX_TILE_B))
    tile_b = ((tile_b + LANE - 1) // LANE) * LANE
    num_tiles = pl.cdiv(B, tile_b)
    b_pad = num_tiles * tile_b
    if b_pad != B:
        x = jnp.pad(x, ((0, b_pad - B), (0, 0)))

    # ---- feature-major layer-3 params: w3^T [out, in], sublane-padded ----
    n_act_pad = ((n_actions + SUBLANE - 1) // SUBLANE) * SUBLANE   # e.g. 2 -> 8
    w3t = jnp.transpose(w3)                       # (n_actions, HIDDEN)
    b3t = jnp.reshape(b3, (n_actions, 1))
    if n_act_pad != n_actions:
        w3t = jnp.pad(w3t, ((0, n_act_pad - n_actions), (0, 0)))
        b3t = jnp.pad(b3t, ((0, n_act_pad - n_actions), (0, 0)))

    # ---- dtypes: x/w1 stay f32 (layer 1 is VPU math, x DMA is tiny);
    #      w2/w3^T feed the MXU in compute_dtype; biases stay f32 ----
    x_f32 = x.astype(jnp.float32)
    w2_c = w2.astype(compute_dtype)
    w3t_c = w3t.astype(compute_dtype)

    itemsize = jnp.dtype(compute_dtype).itemsize
    flops = 2 * b_pad * (n_obs * HIDDEN + HIDDEN * HIDDEN + HIDDEN * n_act_pad)
    bytes_accessed = (
        (x_f32.size + w1.size + b1.size + b2.size + b3t.size) * 4
        + (w2_c.size + w3t_c.size) * itemsize
        + n_act_pad * b_pad * 4
    )

    grid_spec = pltpu.PrefetchScalarGridSpec(
        num_scalar_prefetch=0,
        grid=(num_tiles,),
        in_specs=[
            pl.BlockSpec((tile_b, n_obs), lambda i: (i, 0)),   # x tile (pipelined)
            _resident_spec((n_obs, HIDDEN)),                   # w1
            _resident_spec((1, HIDDEN)),                       # b1
            _resident_spec((HIDDEN, HIDDEN)),                  # w2
            _resident_spec((1, HIDDEN)),                       # b2
            _resident_spec((n_act_pad, HIDDEN)),               # w3^T (sublane-padded)
            _resident_spec((n_act_pad, 1)),                    # b3^T
        ],
        out_specs=pl.BlockSpec((n_act_pad, tile_b), lambda i: (0, i)),
    )

    out_t_padded = pl.pallas_call(
        _dqn_kernel,
        out_shape=jax.ShapeDtypeStruct((n_act_pad, b_pad), jnp.float32),
        grid_spec=grid_spec,
        compiler_params=pltpu.CompilerParams(
            dimension_semantics=("parallel",),
        ),
        cost_estimate=pl.CostEstimate(
            flops=flops, transcendentals=0, bytes_accessed=bytes_accessed),
    )(x_f32, w1, b1, w2_c, b2, w3t_c, b3t)

    return out_t_padded[:n_actions, :B].T


def init_dqn_params(key, n_observations, n_actions):
    """PyTorch nn.Linear default init: U(-1/sqrt(fan_in), 1/sqrt(fan_in)).
    Weights stored [in, out]; biases stored (1, out) (2-D, TPU-friendly)."""
    def linear(key, fan_in, fan_out):
        kw, kb = jax.random.split(key)
        bound = 1.0 / jnp.sqrt(jnp.float32(fan_in))
        w = jax.random.uniform(kw, (fan_in, fan_out), jnp.float32, -bound, bound)
        b = jax.random.uniform(kb, (1, fan_out), jnp.float32, -bound, bound)
        return w, b

    k1, k2, k3 = jax.random.split(key, 3)
    w1, b1 = linear(k1, n_observations, HIDDEN)
    w2, b2 = linear(k2, HIDDEN, HIDDEN)
    w3, b3 = linear(k3, HIDDEN, n_actions)
    return {"w1": w1, "b1": b1, "w2": w2, "b2": b2, "w3": w3, "b3": b3}


def dqn_reference(x, p):
    h1 = jnp.maximum(x @ p["w1"] + p["b1"], 0.0)
    h2 = jnp.maximum(h1 @ p["w2"] + p["b2"], 0.0)
    return h2 @ p["w3"] + p["b3"]


if __name__ == "__main__":
    key = jax.random.PRNGKey(0)
    n_observations = 4   # CartPole observation dim
    n_actions = 2        # CartPole action dim

    kx, kp, kt = jax.random.split(key, 3)
    params = init_dqn_params(kp, n_observations, n_actions)

    # --- act-time path: tiny batch (B=2), bit-faithful f32 path ---
    x_small = jax.random.normal(kx, (2, n_observations), jnp.float32)
    out_small = dqn_forward(x_small, params, compute_dtype=jnp.float32)
    jax.block_until_ready(out_small)
    ref_small = dqn_reference(x_small, params)
    assert out_small.shape == (2, n_actions)
    assert jnp.allclose(out_small, ref_small, atol=1e-5, rtol=1e-5)

    # --- training path: small tile forced to exercise the multi-tile grid and
    #     the transposed-output index_map ---
    x_train = jax.random.normal(kt, (256, n_observations), jnp.float32)
    ref_train = dqn_reference(x_train, params)

    out_f32 = dqn_forward(x_train, params, tile_b=128, compute_dtype=jnp.float32)
    jax.block_until_ready(out_f32)
    assert out_f32.shape == (256, n_actions)
    assert jnp.allclose(out_f32, ref_train, atol=1e-5, rtol=1e-5)

    # --- generation-aware defaults (auto tile, auto dtype: bf16 on v6e/v7x) ---
    out_auto = dqn_forward(x_train, params)
    jax.block_until_ready(out_auto)
    assert out_auto.shape == (256, n_actions)
    assert jnp.allclose(out_auto, ref_train, atol=1e-1, rtol=1e-1)

    # --- explicit bf16 MXU fast path (f32 accumulation & epilogue) ---
    # TODO(synk): validate bf16 activations on real DQN training before making
    # it the default everywhere (act re-quantized between layers).
    out_bf16 = dqn_forward(x_train, params, compute_dtype=jnp.bfloat16)
    jax.block_until_ready(out_bf16)
    assert out_bf16.shape == (256, n_actions)
    assert jnp.allclose(out_bf16, ref_train, atol=1e-1, rtol=1e-1)

    print("KERNEL_OK")
</pallas_src>

<mosaic_0001>
module attributes {stable_mosaic.version = 11 : i64} {
  func.func @_dqn_kernel(%arg0: i32, %arg1: memref<128x4xf32, #tpu.memory_space<vmem>>, %arg2: memref<4x128xf32, #tpu.memory_space<vmem>>, %arg3: memref<1x128xf32, #tpu.memory_space<vmem>>, %arg4: memref<128x128xf32, #tpu.memory_space<vmem>>, %arg5: memref<1x128xf32, #tpu.memory_space<vmem>>, %arg6: memref<8x128xf32, #tpu.memory_space<vmem>>, %arg7: memref<8x1xf32, #tpu.memory_space<vmem>>, %arg8: memref<8x128xf32, #tpu.memory_space<vmem>>) attributes {dimension_semantics = [#tpu.dimension_semantics<parallel>], iteration_bounds = array<i64: 1>, scalar_prefetch = 0 : i64, scratch_operands = 0 : i64, tpu.core_type = #tpu.core_type<tc>, window_params = [{transform_indices = @transform_0, window_bounds = array<i64: 128, 4>}, {pipeline_mode = #tpu.pipeline_mode<synchronous>, transform_indices = @transform_1, window_bounds = array<i64: 4, 128>}, {pipeline_mode = #tpu.pipeline_mode<synchronous>, transform_indices = @transform_2, window_bounds = array<i64: 1, 128>}, {pipeline_mode = #tpu.pipeline_mode<synchronous>, transform_indices = @transform_3, window_bounds = array<i64: 128, 128>}, {pipeline_mode = #tpu.pipeline_mode<synchronous>, transform_indices = @transform_4, window_bounds = array<i64: 1, 128>}, {pipeline_mode = #tpu.pipeline_mode<synchronous>, transform_indices = @transform_5, window_bounds = array<i64: 8, 128>}, {pipeline_mode = #tpu.pipeline_mode<synchronous>, transform_indices = @transform_6, window_bounds = array<i64: 8, 1>}, {transform_indices = @transform_7, window_bounds = array<i64: 8, 128>}]} {
    %c0 = arith.constant 0 : index
    %c0_0 = arith.constant 0 : index
    %0 = vector.load %arg1[%c0, %c0_0] : memref<128x4xf32, #tpu.memory_space<vmem>>, vector<128x4xf32>
    %c0_1 = arith.constant 0 : index
    %c0_2 = arith.constant 0 : index
    %1 = vector.load %arg2[%c0_1, %c0_2] : memref<4x128xf32, #tpu.memory_space<vmem>>, vector<4x128xf32>
    %2 = vector.extract_strided_slice %0 {offsets = [0, 0], sizes = [128, 1], strides = [1, 1]} : vector<128x4xf32> to vector<128x1xf32>
    %3 = vector.extract_strided_slice %1 {offsets = [0, 0], sizes = [1, 128], strides = [1, 1]} : vector<4x128xf32> to vector<1x128xf32>
    %4 = vector.broadcast %2 : vector<128x1xf32> to vector<128x128xf32>
    %5 = vector.broadcast %3 : vector<1x128xf32> to vector<128x128xf32>
    %6 = arith.mulf %4, %5 : vector<128x128xf32>
    %7 = vector.extract_strided_slice %0 {offsets = [0, 1], sizes = [128, 1], strides = [1, 1]} : vector<128x4xf32> to vector<128x1xf32>
    %8 = vector.extract_strided_slice %1 {offsets = [1, 0], sizes = [1, 128], strides = [1, 1]} : vector<4x128xf32> to vector<1x128xf32>
    %9 = vector.broadcast %7 : vector<128x1xf32> to vector<128x128xf32>
    %10 = vector.broadcast %8 : vector<1x128xf32> to vector<128x128xf32>
    %11 = arith.mulf %9, %10 : vector<128x128xf32>
    %12 = arith.addf %6, %11 : vector<128x128xf32>
    %13 = vector.extract_strided_slice %0 {offsets = [0, 2], sizes = [128, 1], strides = [1, 1]} : vector<128x4xf32> to vector<128x1xf32>
    %14 = vector.extract_strided_slice %1 {offsets = [2, 0], sizes = [1, 128], strides = [1, 1]} : vector<4x128xf32> to vector<1x128xf32>
    %15 = vector.broadcast %13 : vector<128x1xf32> to vector<128x128xf32>
    %16 = vector.broadcast %14 : vector<1x128xf32> to vector<128x128xf32>
    %17 = arith.mulf %15, %16 : vector<128x128xf32>
    %18 = arith.addf %12, %17 : vector<128x128xf32>
    %19 = vector.extract_strided_slice %0 {offsets = [0, 3], sizes = [128, 1], strides = [1, 1]} : vector<128x4xf32> to vector<128x1xf32>
    %20 = vector.extract_strided_slice %1 {offsets = [3, 0], sizes = [1, 128], strides = [1, 1]} : vector<4x128xf32> to vector<1x128xf32>
    %21 = vector.broadcast %19 : vector<128x1xf32> to vector<128x128xf32>
    %22 = vector.broadcast %20 : vector<1x128xf32> to vector<128x128xf32>
    %23 = arith.mulf %21, %22 : vector<128x128xf32>
    %24 = arith.addf %18, %23 : vector<128x128xf32>
    %c0_3 = arith.constant 0 : index
    %c0_4 = arith.constant 0 : index
    %25 = vector.load %arg3[%c0_3, %c0_4] : memref<1x128xf32, #tpu.memory_space<vmem>>, vector<1x128xf32>
    %26 = vector.broadcast %25 : vector<1x128xf32> to vector<128x128xf32>
    %27 = arith.addf %24, %26 : vector<128x128xf32>
    %cst = arith.constant 0.000000e+00 : f32
    %28 = vector.broadcast %cst : f32 to vector<128x128xf32>
    %29 = arith.maximumf %27, %28 : vector<128x128xf32>
    %c0_5 = arith.constant 0 : index
    %c0_6 = arith.constant 0 : index
    %30 = vector.load %arg4[%c0_5, %c0_6] : memref<128x128xf32, #tpu.memory_space<vmem>>, vector<128x128xf32>
    %cst_7 = arith.constant dense<0.000000e+00> : vector<128x128xf32>
    %31 = tpu.matmul %29, %30, %cst_7 {dimension_numbers = #tpu.dot_dimension_numbers<[1], [0], [0], [1], [0, 0, 1, 1], [], []>} : vector<128x128xf32>, vector<128x128xf32>, vector<128x128xf32> -> vector<128x128xf32>
    %c0_8 = arith.constant 0 : index
    %c0_9 = arith.constant 0 : index
    %32 = vector.load %arg5[%c0_8, %c0_9] : memref<1x128xf32, #tpu.memory_space<vmem>>, vector<1x128xf32>
    %33 = vector.broadcast %32 : vector<1x128xf32> to vector<128x128xf32>
    %34 = arith.addf %31, %33 : vector<128x128xf32>
    %cst_10 = arith.constant 0.000000e+00 : f32
    %35 = vector.broadcast %cst_10 : f32 to vector<128x128xf32>
    %36 = arith.maximumf %34, %35 : vector<128x128xf32>
    %c0_11 = arith.constant 0 : index
    %c0_12 = arith.constant 0 : index
    %37 = vector.load %arg6[%c0_11, %c0_12] : memref<8x128xf32, #tpu.memory_space<vmem>>, vector<8x128xf32>
    %cst_13 = arith.constant dense<0.000000e+00> : vector<8x128xf32>
    %38 = tpu.matmul %37, %36, %cst_13 {dimension_numbers = #tpu.dot_dimension_numbers<[1], [1], [0], [0], [0, 0, 1, 0], [], []>} : vector<8x128xf32>, vector<128x128xf32>, vector<8x128xf32> -> vector<8x128xf32>
    %c0_14 = arith.constant 0 : index
    %c0_15 = arith.constant 0 : index
    %39 = vector.load %arg7[%c0_14, %c0_15] : memref<8x1xf32, #tpu.memory_space<vmem>>, vector<8x1xf32>
    %40 = vector.broadcast %39 : vector<8x1xf32> to vector<8x128xf32>
    %41 = arith.addf %38, %40 : vector<8x128xf32>
    %c0_16 = arith.constant 0 : index
    %c0_17 = arith.constant 0 : index
    %42 = vector.load %arg8[%c0_16, %c0_17] : memref<8x128xf32, #tpu.memory_space<vmem>>, vector<8x128xf32>
    tpu.vector_store %arg8[%c0_16, %c0_17], %41 {strides = array<i32>} : memref<8x128xf32, #tpu.memory_space<vmem>>, vector<8x128xf32>,
    return
  }
  func.func @transform_0(%arg0: i32) -> (i32, i32) {
    %c0_i32 = arith.constant 0 : i32
    %c0_i32_0 = arith.constant 0 : i32
    return %arg0, %c0_i32 : i32, i32
  }
  func.func @transform_1(%arg0: i32) -> (i32, i32) {
    %c0_i32 = arith.constant 0 : i32
    %c0_i32_0 = arith.constant 0 : i32
    %c0_i32_1 = arith.constant 0 : i32
    return %c0_i32, %c0_i32_0 : i32, i32
  }
  func.func @transform_2(%arg0: i32) -> (i32, i32) {
    %c0_i32 = arith.constant 0 : i32
    %c0_i32_0 = arith.constant 0 : i32
    %c0_i32_1 = arith.constant 0 : i32
    return %c0_i32, %c0_i32_0 : i32, i32
  }
  func.func @transform_3(%arg0: i32) -> (i32, i32) {
    %c0_i32 = arith.constant 0 : i32
    %c0_i32_0 = arith.constant 0 : i32
    %c0_i32_1 = arith.constant 0 : i32
    return %c0_i32, %c0_i32_0 : i32, i32
  }
  func.func @transform_4(%arg0: i32) -> (i32, i32) {
    %c0_i32 = arith.constant 0 : i32
    %c0_i32_0 = arith.constant 0 : i32
    %c0_i32_1 = arith.constant 0 : i32
    return %c0_i32, %c0_i32_0 : i32, i32
  }
  func.func @transform_5(%arg0: i32) -> (i32, i32) {
    %c0_i32 = arith.constant 0 : i32
    %c0_i32_0 = arith.constant 0 : i32
    %c0_i32_1 = arith.constant 0 : i32
    return %c0_i32, %c0_i32_0 : i32, i32
  }
  func.func @transform_6(%arg0: i32) -> (i32, i32) {
    %c0_i32 = arith.constant 0 : i32
    %c0_i32_0 = arith.constant 0 : i32
    %c0_i32_1 = arith.constant 0 : i32
    return %c0_i32, %c0_i32_0 : i32, i32
  }
  func.func @transform_7(%arg0: i32) -> (i32, i32) {
    %c0_i32 = arith.constant 0 : i32
    %c0_i32_0 = arith.constant 0 : i32
    return %c0_i32, %arg0 : i32, i32
  }
}

</mosaic_0001>

<llo_original>
// kernel: tpu_custom_call.1
$region0: #{tpu_custom_call.1}
  #allocation0 [shape = 'u32[]', space=smem, size = 0x4, offset = 0x4, fixed_abs, tag = 'smem constant byte address 0x4 - core index']
  #allocation1 [shape = 'u32[144,128]{1,0:T(1,128)}', space=vmem, size = 0x12000, scoped, tag = 'internal scratch']
  %s0 = inlined_call_operand.vmem [shape: f32[128,4], index: 0, kind: input, shape index: {}]
  %s1 = inlined_call_operand.vmem [shape: f32[4,128], index: 1, kind: input, shape index: {}]
  %s2 = inlined_call_operand.vmem [shape: f32[1,128], index: 2, kind: input, shape index: {}]
  %s3 = inlined_call_operand.vmem [shape: f32[128,128], index: 3, kind: input, shape index: {}]
  %s4 = inlined_call_operand.vmem [shape: f32[1,128], index: 4, kind: input, shape index: {}]
  %s5 = inlined_call_operand.vmem [shape: f32[8,128], index: 5, kind: input, shape index: {}]
  %s6 = inlined_call_operand.vmem [shape: f32[8,1], index: 6, kind: input, shape index: {}]
  %s7 = inlined_call_operand.hbm [shape: f32[8,128], index: 7, kind: output, shape index: {}]
  %s8 = sld [smem:[#allocation0]]
  $region38: #{tpu_custom_call.1} parent=0
    _
  %s10 = ssub.s32 1, %s8
  %s11 = scalar_select 0, %s10, %s8
  $region1: #{tpu_custom_call.1} parent=0
    #allocation2 [shape = 'u8[4096]{0}', space=vmem, size = 0x1000, scoped, tag = 'output window, operand 0, single buffered']
    #allocation3 [shape = 's32[1]{0}', space=sflag, size = 0x4, scoped, tag = 'scoped memory for tpu_custom_call.1']
    %12 = vsyncpa [#allocation3], 0
    // Predicated region
    $region2: #{tpu_custom_call.1} parent=1 // pred_check
      _
    $region3: #{tpu_custom_call.1} parent=1 // pred_check_branch
      %14 = sbr.rel (0) target = $region5
    $region4: #{tpu_custom_call.1} parent=1 // pred_region
      _
    $region5: #{tpu_custom_call.1} parent=1 // pred_fallthru
      _
    // Predicated region
    $region6: #{tpu_custom_call.1} parent=1 // pred_check
      _
    $region7: #{tpu_custom_call.1} parent=1 // pred_check_branch
      %16 = sbr.rel (0) target = $region9
    $region8: #{tpu_custom_call.1} parent=1 // pred_region
      _
    $region9: #{tpu_custom_call.1} parent=1 // pred_fallthru
      _
    // Predicated region
    $region10: #{tpu_custom_call.1} parent=1 // pred_check
      _
    $region11: #{tpu_custom_call.1} parent=1 // pred_check_branch
      %18 = sbr.rel (0) target = $region13
    $region12: #{tpu_custom_call.1} parent=1 // pred_region
      _
    $region13: #{tpu_custom_call.1} parent=1 // pred_fallthru
      _
    // Predicated region
    $region14: #{tpu_custom_call.1} parent=1 // pred_check
      _
    $region15: #{tpu_custom_call.1} parent=1 // pred_check_branch
      %20 = sbr.rel (0) target = $region17
    $region16: #{tpu_custom_call.1} parent=1 // pred_region
      _
    $region17: #{tpu_custom_call.1} parent=1 // pred_fallthru
      _
    // Predicated region
    $region18: #{tpu_custom_call.1} parent=1 // pred_check
      _
    $region19: #{tpu_custom_call.1} parent=1 // pred_check_branch
      %22 = sbr.rel (0) target = $region21
    $region20: #{tpu_custom_call.1} parent=1 // pred_region
      _
    $region21: #{tpu_custom_call.1} parent=1 // pred_fallthru
      _
    // Predicated region
    $region22: #{tpu_custom_call.1} parent=1 // pred_check
      _
    $region23: #{tpu_custom_call.1} parent=1 // pred_check_branch
      %24 = sbr.rel (0) target = $region25
    $region24: #{tpu_custom_call.1} parent=1 // pred_region
      _
    $region25: #{tpu_custom_call.1} parent=1 // pred_fallthru
      _
    // Predicated region
    $region26: #{tpu_custom_call.1} parent=1 // pred_check
      _
    $region27: #{tpu_custom_call.1} parent=1 // pred_check_branch
      %26 = sbr.rel (0) target = $region29
    $region28: #{tpu_custom_call.1} parent=1 // pred_region
      _
    $region29: #{tpu_custom_call.1} parent=1 // pred_fallthru
      _
    %v27 = vld [vmem:[%s0] sm:$0xff]
    %v28 = vld [vmem:[%s0 + $0x8] sm:$0xff]
    %v29 = vld [vmem:[%s0 + $0x10] sm:$0xff]
    %v30 = vld [vmem:[%s0 + $0x18] sm:$0xff]
    %v31 = vld [vmem:[%s0 + $0x20] sm:$0xff]
    %v32 = vld [vmem:[%s0 + $0x28] sm:$0xff]
    %v33 = vld [vmem:[%s0 + $0x30] sm:$0xff]
    %v34 = vld [vmem:[%s0 + $0x38] sm:$0xff]
    %v35 = vld [vmem:[%s0 + $0x40] sm:$0xff]
    %v36 = vld [vmem:[%s0 + $0x48] sm:$0xff]
    %v37 = vld [vmem:[%s0 + $0x50] sm:$0xff]
    %v38 = vld [vmem:[%s0 + $0x58] sm:$0xff]
    %v39 = vld [vmem:[%s0 + $0x60] sm:$0xff]
    %v40 = vld [vmem:[%s0 + $0x68] sm:$0xff]
    %v41 = vld [vmem:[%s0 + $0x70] sm:$0xff]
    %v42 = vld [vmem:[%s0 + $0x78] sm:$0xff]
    %v43 = vld [vmem:[%s1] sm:$0xf]
    %45 = vset.pattern.permute.xlu0 0
    %46 = vperm.xlu0 %45, %v27
    %v47 = vpop.permute.xlu0 %46
    %50 = vset.pattern.permute.xlu0 0
    %51 = vperm.xlu0 %50, %v28
    %v52 = vpop.permute.xlu0 %51
    %55 = vset.pattern.permute.xlu0 0
    %56 = vperm.xlu0 %55, %v29
    %v57 = vpop.permute.xlu0 %56
    %60 = vset.pattern.permute.xlu0 0
    %61 = vperm.xlu0 %60, %v30
    %v62 = vpop.permute.xlu0 %61
    %65 = vset.pattern.permute.xlu0 0
    %66 = vperm.xlu0 %65, %v31
    %v67 = vpop.permute.xlu0 %66
    %70 = vset.pattern.permute.xlu0 0
    %71 = vperm.xlu0 %70, %v32
    %v72 = vpop.permute.xlu0 %71
    %75 = vset.pattern.permute.xlu0 0
    %76 = vperm.xlu0 %75, %v33
    %v77 = vpop.permute.xlu0 %76
    %80 = vset.pattern.permute.xlu0 0
    %81 = vperm.xlu0 %80, %v34
    %v82 = vpop.permute.xlu0 %81
    %85 = vset.pattern.permute.xlu0 0
    %86 = vperm.xlu0 %85, %v35
    %v87 = vpop.permute.xlu0 %86
    %90 = vset.pattern.permute.xlu0 0
    %91 = vperm.xlu0 %90, %v36
    %v92 = vpop.permute.xlu0 %91
    %95 = vset.pattern.permute.xlu0 0
    %96 = vperm.xlu0 %95, %v37
    %v97 = vpop.permute.xlu0 %96
    %100 = vset.pattern.permute.xlu0 0
    %101 = vperm.xlu0 %100, %v38
    %v102 = vpop.permute.xlu0 %101
    %105 = vset.pattern.permute.xlu0 0
    %106 = vperm.xlu0 %105, %v39
    %v107 = vpop.permute.xlu0 %106
    %110 = vset.pattern.permute.xlu0 0
    %111 = vperm.xlu0 %110, %v40
    %v112 = vpop.permute.xlu0 %111
    %115 = vset.pattern.permute.xlu0 0
    %116 = vperm.xlu0 %115, %v41
    %v117 = vpop.permute.xlu0 %116
    %120 = vset.pattern.permute.xlu0 0
    %121 = vperm.xlu0 %120, %v42
    %v122 = vpop.permute.xlu0 %121
    %v124 = vlaneseq
    %v125 = vshrl.u32 %v124, 7
    %v126 = vsub.s32 0, %v125
    %v127 = vrot.slane %v43, %v126
    %v128 = vmul.f32 %v47, %v127
    %v129 = vmul.f32 %v52, %v127
    %v130 = vmul.f32 %v57, %v127
    %v131 = vmul.f32 %v62, %v127
    %v132 = vmul.f32 %v67, %v127
    %v133 = vmul.f32 %v72, %v127
    %v134 = vmul.f32 %v77, %v127
    %v135 = vmul.f32 %v82, %v127
    %v136 = vmul.f32 %v87, %v127
    %v137 = vmul.f32 %v92, %v127
    %v138 = vmul.f32 %v97, %v127
    %v139 = vmul.f32 %v102, %v127
    %v140 = vmul.f32 %v107, %v127
    %v141 = vmul.f32 %v112, %v127
    %v142 = vmul.f32 %v117, %v127
    %v143 = vmul.f32 %v122, %v127
    %144 = vset.pattern.permute.xlu0 1
    %145 = vperm.xlu0 %144, %v27
    %v146 = vpop.permute.xlu0 %145
    %148 = vset.pattern.permute.xlu0 1
    %149 = vperm.xlu0 %148, %v28
    %v150 = vpop.permute.xlu0 %149
    %152 = vset.pattern.permute.xlu0 1
    %153 = vperm.xlu0 %152, %v29
    %v154 = vpop.permute.xlu0 %153
    %156 = vset.pattern.permute.xlu0 1
    %157 = vperm.xlu0 %156, %v30
    %v158 = vpop.permute.xlu0 %157
    %160 = vset.pattern.permute.xlu0 1
    %161 = vperm.xlu0 %160, %v31
    %v162 = vpop.permute.xlu0 %161
    %164 = vset.pattern.permute.xlu0 1
    %165 = vperm.xlu0 %164, %v32
    %v166 = vpop.permute.xlu0 %165
    %168 = vset.pattern.permute.xlu0 1
    %169 = vperm.xlu0 %168, %v33
    %v170 = vpop.permute.xlu0 %169
    %172 = vset.pattern.permute.xlu0 1
    %173 = vperm.xlu0 %172, %v34
    %v174 = vpop.permute.xlu0 %173
    %176 = vset.pattern.permute.xlu0 1
    %177 = vperm.xlu0 %176, %v35
    %v178 = vpop.permute.xlu0 %177
    %180 = vset.pattern.permute.xlu0 1
    %181 = vperm.xlu0 %180, %v36
    %v182 = vpop.permute.xlu0 %181
    %184 = vset.pattern.permute.xlu0 1
    %185 = vperm.xlu0 %184, %v37
    %v186 = vpop.permute.xlu0 %185
    %188 = vset.pattern.permute.xlu0 1
    %189 = vperm.xlu0 %188, %v38
    %v190 = vpop.permute.xlu0 %189
    %192 = vset.pattern.permute.xlu0 1
    %193 = vperm.xlu0 %192, %v39
    %v194 = vpop.permute.xlu0 %193
    %196 = vset.pattern.permute.xlu0 1
    %197 = vperm.xlu0 %196, %v40
    %v198 = vpop.permute.xlu0 %197
    %200 = vset.pattern.permute.xlu0 1
    %201 = vperm.xlu0 %200, %v41
    %v202 = vpop.permute.xlu0 %201
    %204 = vset.pattern.permute.xlu0 1
    %205 = vperm.xlu0 %204, %v42
    %v206 = vpop.permute.xlu0 %205
    %v208 = vlaneseq
    %v209 = vshrl.u32 %v208, 7
    %v210 = vsub.s32 1, %v209
    %v211 = vrot.slane %v43, %v210
    %v212 = vmul.f32 %v146, %v211
    %v213 = vmul.f32 %v150, %v211
    %v214 = vmul.f32 %v154, %v211
    %v215 = vmul.f32 %v158, %v211
    %v216 = vmul.f32 %v162, %v211
    %v217 = vmul.f32 %v166, %v211
    %v218 = vmul.f32 %v170, %v211
    %v219 = vmul.f32 %v174, %v211
    %v220 = vmul.f32 %v178, %v211
    %v221 = vmul.f32 %v182, %v211
    %v222 = vmul.f32 %v186, %v211
    %v223 = vmul.f32 %v190, %v211
    %v224 = vmul.f32 %v194, %v211
    %v225 = vmul.f32 %v198, %v211
    %v226 = vmul.f32 %v202, %v211
    %v227 = vmul.f32 %v206, %v211
    %v228 = vadd.f32 %v128, %v212
    %v229 = vadd.f32 %v129, %v213
    %v230 = vadd.f32 %v130, %v214
    %v231 = vadd.f32 %v131, %v215
    %v232 = vadd.f32 %v132, %v216
    %v233 = vadd.f32 %v133, %v217
    %v234 = vadd.f32 %v134, %v218
    %v235 = vadd.f32 %v135, %v219
    %v236 = vadd.f32 %v136, %v220
    %v237 = vadd.f32 %v137, %v221
    %v238 = vadd.f32 %v138, %v222
    %v239 = vadd.f32 %v139, %v223
    %v240 = vadd.f32 %v140, %v224
    %v241 = vadd.f32 %v141, %v225
    %v242 = vadd.f32 %v142, %v226
    %v243 = vadd.f32 %v143, %v227
    %244 = vset.pattern.permute.xlu0 2
    %245 = vperm.xlu0 %244, %v27
    %v246 = vpop.permute.xlu0 %245
    %248 = vset.pattern.permute.xlu0 2
    %249 = vperm.xlu0 %248, %v28
    %v250 = vpop.permute.xlu0 %249
    %252 = vset.pattern.permute.xlu0 2
    %253 = vperm.xlu0 %252, %v29
    %v254 = vpop.permute.xlu0 %253
    %256 = vset.pattern.permute.xlu0 2
    %257 = vperm.xlu0 %256, %v30
    %v258 = vpop.permute.xlu0 %257
    %260 = vset.pattern.permute.xlu0 2
    %261 = vperm.xlu0 %260, %v31
    %v262 = vpop.permute.xlu0 %261
    %264 = vset.pattern.permute.xlu0 2
    %265 = vperm.xlu0 %264, %v32
    %v266 = vpop.permute.xlu0 %265
    %268 = vset.pattern.permute.xlu0 2
    %269 = vperm.xlu0 %268, %v33
    %v270 = vpop.permute.xlu0 %269
    %272 = vset.pattern.permute.xlu0 2
    %273 = vperm.xlu0 %272, %v34
    %v274 = vpop.permute.xlu0 %273
    %276 = vset.pattern.permute.xlu0 2
    %277 = vperm.xlu0 %276, %v35
    %v278 = vpop.permute.xlu0 %277
    %280 = vset.pattern.permute.xlu0 2
    %281 = vperm.xlu0 %280, %v36
    %v282 = vpop.permute.xlu0 %281
    %284 = vset.pattern.permute.xlu0 2
    %285 = vperm.xlu0 %284, %v37
    %v286 = vpop.permute.xlu0 %285
    %288 = vset.pattern.permute.xlu0 2
    %289 = vperm.xlu0 %288, %v38
    %v290 = vpop.permute.xlu0 %289
    %292 = vset.pattern.permute.xlu0 2
    %293 = vperm.xlu0 %292, %v39
    %v294 = vpop.permute.xlu0 %293
    %296 = vset.pattern.permute.xlu0 2
    %297 = vperm.xlu0 %296, %v40
    %v298 = vpop.permute.xlu0 %297
    %300 = vset.pattern.permute.xlu0 2
    %301 = vperm.xlu0 %300, %v41
    %v302 = vpop.permute.xlu0 %301
    %304 = vset.pattern.permute.xlu0 2
    %305 = vperm.xlu0 %304, %v42
    %v306 = vpop.permute.xlu0 %305
    %v308 = vlaneseq
    %v309 = vshrl.u32 %v308, 7
    %v310 = vsub.s32 2, %v309
    %v311 = vrot.slane %v43, %v310
    %v312 = vmul.f32 %v246, %v311
    %v313 = vmul.f32 %v250, %v311
    %v314 = vmul.f32 %v254, %v311
    %v315 = vmul.f32 %v258, %v311
    %v316 = vmul.f32 %v262, %v311
    %v317 = vmul.f32 %v266, %v311
    %v318 = vmul.f32 %v270, %v311
    %v319 = vmul.f32 %v274, %v311
    %v320 = vmul.f32 %v278, %v311
    %v321 = vmul.f32 %v282, %v311
    %v322 = vmul.f32 %v286, %v311
    %v323 = vmul.f32 %v290, %v311
    %v324 = vmul.f32 %v294, %v311
    %v325 = vmul.f32 %v298, %v311
    %v326 = vmul.f32 %v302, %v311
    %v327 = vmul.f32 %v306, %v311
    %v328 = vadd.f32 %v228, %v312
    %v329 = vadd.f32 %v229, %v313
    %v330 = vadd.f32 %v230, %v314
    %v331 = vadd.f32 %v231, %v315
    %v332 = vadd.f32 %v232, %v316
    %v333 = vadd.f32 %v233, %v317
    %v334 = vadd.f32 %v234, %v318
    %v335 = vadd.f32 %v235, %v319
    %v336 = vadd.f32 %v236, %v320
    %v337 = vadd.f32 %v237, %v321
    %v338 = vadd.f32 %v238, %v322
    %v339 = vadd.f32 %v239, %v323
    %v340 = vadd.f32 %v240, %v324
    %v341 = vadd.f32 %v241, %v325
    %v342 = vadd.f32 %v242, %v326
    %v343 = vadd.f32 %v243, %v327
    %344 = vset.pattern.permute.xlu0 3
    %345 = vperm.xlu0 %344, %v27
    %v346 = vpop.permute.xlu0 %345
    %348 = vset.pattern.permute.xlu0 3
    %349 = vperm.xlu0 %348, %v28
    %v350 = vpop.permute.xlu0 %349
    %352 = vset.pattern.permute.xlu0 3
    %353 = vperm.xlu0 %352, %v29
    %v354 = vpop.permute.xlu0 %353
    %356 = vset.pattern.permute.xlu0 3
    %357 = vperm.xlu0 %356, %v30
    %v358 = vpop.permute.xlu0 %357
    %360 = vset.pattern.permute.xlu0 3
    %361 = vperm.xlu0 %360, %v31
    %v362 = vpop.permute.xlu0 %361
    %364 = vset.pattern.permute.xlu0 3
    %365 = vperm.xlu0 %364, %v32
    %v366 = vpop.permute.xlu0 %365
    %368 = vset.pattern.permute.xlu0 3
    %369 = vperm.xlu0 %368, %v33
    %v370 = vpop.permute.xlu0 %369
    %372 = vset.pattern.permute.xlu0 3
    %373 = vperm.xlu0 %372, %v34
    %v374 = vpop.permute.xlu0 %373
    %376 = vset.pattern.permute.xlu0 3
    %377 = vperm.xlu0 %376, %v35
    %v378 = vpop.permute.xlu0 %377
    %380 = vset.pattern.permute.xlu0 3
    %381 = vperm.xlu0 %380, %v36
    %v382 = vpop.permute.xlu0 %381
    %384 = vset.pattern.permute.xlu0 3
    %385 = vperm.xlu0 %384, %v37
    %v386 = vpop.permute.xlu0 %385
    %388 = vset.pattern.permute.xlu0 3
    %389 = vperm.xlu0 %388, %v38
    %v390 = vpop.permute.xlu0 %389
    %392 = vset.pattern.permute.xlu0 3
    %393 = vperm.xlu0 %392, %v39
    %v394 = vpop.permute.xlu0 %393
    %396 = vset.pattern.permute.xlu0 3
    %397 = vperm.xlu0 %396, %v40
    %v398 = vpop.permute.xlu0 %397
    %400 = vset.pattern.permute.xlu0 3
    %401 = vperm.xlu0 %400, %v41
    %v402 = vpop.permute.xlu0 %401
    %404 = vset.pattern.permute.xlu0 3
    %405 = vperm.xlu0 %404, %v42
    %v406 = vpop.permute.xlu0 %405
    %v408 = vlaneseq
    %v409 = vshrl.u32 %v408, 7
    %v410 = vsub.s32 3, %v409
    %v411 = vrot.slane %v43, %v410
    %v412 = vmul.f32 %v346, %v411
    %v413 = vmul.f32 %v350, %v411
    %v414 = vmul.f32 %v354, %v411
    %v415 = vmul.f32 %v358, %v411
    %v416 = vmul.f32 %v362, %v411
    %v417 = vmul.f32 %v366, %v411
    %v418 = vmul.f32 %v370, %v411
    %v419 = vmul.f32 %v374, %v411
    %v420 = vmul.f32 %v378, %v411
    %v421 = vmul.f32 %v382, %v411
    %v422 = vmul.f32 %v386, %v411
    %v423 = vmul.f32 %v390, %v411
    %v424 = vmul.f32 %v394, %v411
    %v425 = vmul.f32 %v398, %v411
    %v426 = vmul.f32 %v402, %v411
    %v427 = vmul.f32 %v406, %v411
    %v428 = vadd.f32 %v328, %v412
    %v429 = vadd.f32 %v329, %v413
    %v430 = vadd.f32 %v330, %v414
    %v431 = vadd.f32 %v331, %v415
    %v432 = vadd.f32 %v332, %v416
    %v433 = vadd.f32 %v333, %v417
    %v434 = vadd.f32 %v334, %v418
    %v435 = vadd.f32 %v335, %v419
    %v436 = vadd.f32 %v336, %v420
    %v437 = vadd.f32 %v337, %v421
    %v438 = vadd.f32 %v338, %v422
    %v439 = vadd.f32 %v339, %v423
    %v440 = vadd.f32 %v340, %v424
    %v441 = vadd.f32 %v341, %v425
    %v442 = vadd.f32 %v342, %v426
    %v443 = vadd.f32 %v343, %v427
    %v444 = vld [vmem:[%s2] sm:$0x1]
    %v446 = vlaneseq
    %v447 = vshrl.u32 %v446, 7
    %v448 = vsub.s32 0, %v447
    %v449 = vrot.slane %v444, %v448
    %v451 = vadd.f32 %v428, %v449
    %v452 = vadd.f32 %v429, %v449
    %v453 = vadd.f32 %v430, %v449
    %v454 = vadd.f32 %v431, %v449
    %v455 = vadd.f32 %v432, %v449
    %v456 = vadd.f32 %v433, %v449
    %v457 = vadd.f32 %v434, %v449
    %v458 = vadd.f32 %v435, %v449
    %v459 = vadd.f32 %v436, %v449
    %v460 = vadd.f32 %v437, %v449
    %v461 = vadd.f32 %v438, %v449
    %v462 = vadd.f32 %v439, %v449
    %v463 = vadd.f32 %v440, %v449
    %v464 = vadd.f32 %v441, %v449
    %v465 = vadd.f32 %v442, %v449
    %v466 = vadd.f32 %v443, %v449
    %v467 = vmax.f32 %v451, 0.0
    %v468 = vmax.f32 %v452, 0.0
    %v469 = vmax.f32 %v453, 0.0
    %v470 = vmax.f32 %v454, 0.0
    %v471 = vmax.f32 %v455, 0.0
    %v472 = vmax.f32 %v456, 0.0
    %v473 = vmax.f32 %v457, 0.0
    %v474 = vmax.f32 %v458, 0.0
    %v475 = vmax.f32 %v459, 0.0
    %v476 = vmax.f32 %v460, 0.0
    %v477 = vmax.f32 %v461, 0.0
    %v478 = vmax.f32 %v462, 0.0
    %v479 = vmax.f32 %v463, 0.0
    %v480 = vmax.f32 %v464, 0.0
    %v481 = vmax.f32 %v465, 0.0
    %v482 = vmax.f32 %v466, 0.0
    %v483 = vld [vmem:[%s3] sm:$0xff]
    %v484 = vld [vmem:[%s3 + $0x8] sm:$0xff]
    %v485 = vld [vmem:[%s3 + $0x10] sm:$0xff]
    %v486 = vld [vmem:[%s3 + $0x18] sm:$0xff]
    %v487 = vld [vmem:[%s3 + $0x20] sm:$0xff]
    %v488 = vld [vmem:[%s3 + $0x28] sm:$0xff]
    %v489 = vld [vmem:[%s3 + $0x30] sm:$0xff]
    %v490 = vld [vmem:[%s3 + $0x38] sm:$0xff]
    %v491 = vld [vmem:[%s3 + $0x40] sm:$0xff]
    %v492 = vld [vmem:[%s3 + $0x48] sm:$0xff]
    %v493 = vld [vmem:[%s3 + $0x50] sm:$0xff]
    %v494 = vld [vmem:[%s3 + $0x58] sm:$0xff]
    %v495 = vld [vmem:[%s3 + $0x60] sm:$0xff]
    %v496 = vld [vmem:[%s3 + $0x68] sm:$0xff]
    %v497 = vld [vmem:[%s3 + $0x70] sm:$0xff]
    %v498 = vld [vmem:[%s3 + $0x78] sm:$0xff]
    %v499 = vld [vmem:[%s4] sm:$0x1]
    %v501 = vlaneseq
    %v502 = vshrl.u32 %v501, 7
    %v503 = vsub.s32 0, %v502
    %v504 = vrot.slane %v499, %v503
    %506 = vmatprep.subr.mxu0 0.0
    %507 = vmatpush1.msra.mxu0 %v483
    %508 = vmatprep.subr.mxu0 0.0
    %509 = vmatpush1.msra.mxu0 %v484
    %510 = vmatprep.subr.mxu0 0.0
    %511 = vmatpush1.msra.mxu0 %v485
    %512 = vmatprep.subr.mxu0 0.0
    %513 = vmatpush1.msra.mxu0 %v486
    %514 = vmatprep.subr.mxu0 0.0
    %515 = vmatpush1.msra.mxu0 %v487
    %516 = vmatprep.subr.mxu0 0.0
    %517 = vmatpush1.msra.mxu0 %v488
    %518 = vmatprep.subr.mxu0 0.0
    %519 = vmatpush1.msra.mxu0 %v489
    %520 = vmatprep.subr.mxu0 0.0
    %521 = vmatpush1.msra.mxu0 %v490
    %522 = vmatprep.subr.mxu0 0.0
    %523 = vmatpush1.msra.mxu0 %v491
    %524 = vmatprep.subr.mxu0 0.0
    %525 = vmatpush1.msra.mxu0 %v492
    %526 = vmatprep.subr.mxu0 0.0
    %527 = vmatpush1.msra.mxu0 %v493
    %528 = vmatprep.subr.mxu0 0.0
    %529 = vmatpush1.msra.mxu0 %v494
    %530 = vmatprep.subr.mxu0 0.0
    %531 = vmatpush1.msra.mxu0 %v495
    %532 = vmatprep.subr.mxu0 0.0
    %533 = vmatpush1.msra.mxu0 %v496
    %534 = vmatprep.subr.mxu0 0.0
    %535 = vmatpush1.msra.mxu0 %v497
    %536 = vmatprep.subr.mxu0 0.0
    %537 = vmatpush1.msra.mxu0 %v498
    %538 = vmatprep.subr.mxu0 0.0
    %539 = vmatpush1.msra.mxu0 0.0
    %540 = vmatprep.subr.mxu0 0.0
    %541 = vmatpush1.msra.mxu0 0.0
    %542 = vmatprep.subr.mxu0 0.0
    %543 = vmatpush1.msra.mxu0 0.0
    %544 = vmatprep.subr.mxu0 0.0
    %545 = vmatpush1.msra.mxu0 0.0
    %546 = vmatprep.subr.mxu0 0.0
    %547 = vmatpush1.msra.mxu0 0.0
    %548 = vmatprep.subr.mxu0 0.0
    %549 = vmatpush1.msra.mxu0 0.0
    %550 = vmatprep.subr.mxu0 0.0
    %551 = vmatpush1.msra.mxu0 0.0
    %552 = vmatprep.subr.mxu0 0.0
    %553 = vmatpush1.msra.mxu0 0.0
    %554 = vmatprep.subr.mxu0 0.0
    %555 = vmatpush1.msra.mxu0 0.0
    %556 = vmatprep.subr.mxu0 0.0
    %557 = vmatpush1.msra.mxu0 0.0
    %558 = vmatprep.subr.mxu0 0.0
    %559 = vmatpush1.msra.mxu0 0.0
    %560 = vmatprep.subr.mxu0 0.0
    %561 = vmatpush1.msra.mxu0 0.0
    %562 = vmatprep.subr.mxu0 0.0
    %563 = vmatpush1.msra.mxu0 0.0
    %564 = vmatprep.subr.mxu0 0.0
    %565 = vmatpush1.msra.mxu0 0.0
    %566 = vmatprep.subr.mxu0 0.0
    %567 = vmatpush1.msra.mxu0 0.0
    %568 = vmatprep.subr.mxu0 0.0
    %569 = vmatpush1.msra.mxu0 0.0
    %570 = vmatprep.mubr.f32.mxu0 0.0
    %571 = vmatmul.mubr.f32.gmra.mrb[0].mxu0 %v467
    %v572 = vpop.f32.mrb[0].mxu0
    %v573 = vadd.f32 %v504, %v572
    %v574 = vpop.f32.mrb[0].mxu0
    %575 = vmatprep.mubr.f32.mxu0 0.0
    %576 = vmatmul.mubr.f32.gmra.mrb[0].mxu0 %v468
    %v577 = vpop.f32.mrb[0].mxu0
    %v578 = vadd.f32 %v504, %v577
    %v579 = vpop.f32.mrb[0].mxu0
    %580 = vmatprep.mubr.f32.mxu0 0.0
    %581 = vmatmul.mubr.f32.gmra.mrb[0].mxu0 %v469
    %v582 = vpop.f32.mrb[0].mxu0
    %v583 = vadd.f32 %v504, %v582
    %v584 = vpop.f32.mrb[0].mxu0
    %585 = vmatprep.mubr.f32.mxu0 0.0
    %586 = vmatmul.mubr.f32.gmra.mrb[0].mxu0 %v470
    %v587 = vpop.f32.mrb[0].mxu0
    %v588 = vadd.f32 %v504, %v587
    %v589 = vpop.f32.mrb[0].mxu0
    %590 = vmatprep.mubr.f32.mxu0 0.0
    %591 = vmatmul.mubr.f32.gmra.mrb[0].mxu0 %v471
    %v592 = vpop.f32.mrb[0].mxu0
    %v593 = vadd.f32 %v504, %v592
    %v594 = vpop.f32.mrb[0].mxu0
    %595 = vmatprep.mubr.f32.mxu0 0.0
    %596 = vmatmul.mubr.f32.gmra.mrb[0].mxu0 %v472
    %v597 = vpop.f32.mrb[0].mxu0
    %v598 = vadd.f32 %v504, %v597
    %v599 = vpop.f32.mrb[0].mxu0
    %600 = vmatprep.mubr.f32.mxu0 0.0
    %601 = vmatmul.mubr.f32.gmra.mrb[0].mxu0 %v473
    %v602 = vpop.f32.mrb[0].mxu0
    %v603 = vadd.f32 %v504, %v602
    %v604 = vpop.f32.mrb[0].mxu0
    %605 = vmatprep.mubr.f32.mxu0 0.0
    %606 = vmatmul.mubr.f32.gmra.mrb[0].mxu0 %v474
    %v607 = vpop.f32.mrb[0].mxu0
    %v608 = vadd.f32 %v504, %v607
    %v609 = vpop.f32.mrb[0].mxu0
    %610 = vmatprep.mubr.f32.mxu0 0.0
    %611 = vmatmul.mubr.f32.gmra.mrb[0].mxu0 %v475
    %v612 = vpop.f32.mrb[0].mxu0
    %v613 = vadd.f32 %v504, %v612
    %v614 = vpop.f32.mrb[0].mxu0
    %615 = vmatprep.mubr.f32.mxu0 0.0
    %616 = vmatmul.mubr.f32.gmra.mrb[0].mxu0 %v476
    %v617 = vpop.f32.mrb[0].mxu0
    %v618 = vadd.f32 %v504, %v617
    %v619 = vpop.f32.mrb[0].mxu0
    %620 = vmatprep.mubr.f32.mxu0 0.0
    %621 = vmatmul.mubr.f32.gmra.mrb[0].mxu0 %v477
    %v622 = vpop.f32.mrb[0].mxu0
    %v623 = vadd.f32 %v504, %v622
    %v624 = vpop.f32.mrb[0].mxu0
    %625 = vmatprep.mubr.f32.mxu0 0.0
    %626 = vmatmul.mubr.f32.gmra.mrb[0].mxu0 %v478
    %v627 = vpop.f32.mrb[0].mxu0
    %v628 = vadd.f32 %v504, %v627
    %v629 = vpop.f32.mrb[0].mxu0
    %630 = vmatprep.mubr.f32.mxu0 0.0
    %631 = vmatmul.mubr.f32.gmra.mrb[0].mxu0 %v479
    %v632 = vpop.f32.mrb[0].mxu0
    %v633 = vadd.f32 %v504, %v632
    %v634 = vpop.f32.mrb[0].mxu0
    %635 = vmatprep.mubr.f32.mxu0 0.0
    %636 = vmatmul.mubr.f32.gmra.mrb[0].mxu0 %v480
    %v637 = vpop.f32.mrb[0].mxu0
    %v638 = vadd.f32 %v504, %v637
    %v639 = vpop.f32.mrb[0].mxu0
    %640 = vmatprep.mubr.f32.mxu0 0.0
    %641 = vmatmul.mubr.f32.gmra.mrb[0].mxu0 %v481
    %v642 = vpop.f32.mrb[0].mxu0
    %v643 = vadd.f32 %v504, %v642
    %v644 = vpop.f32.mrb[0].mxu0
    %645 = vmatprep.mubr.f32.mxu0 0.0
    %646 = vmatmul.mubr.f32.gmra.mrb[0].mxu0 %v482
    %v647 = vpop.f32.mrb[0].mxu0
    %v648 = vadd.f32 %v504, %v647
    %v649 = vpop.f32.mrb[0].mxu0
    %650 = vdwg.mxu0
    %v651 = vmax.f32 %v573, 0.0
    %v652 = vmax.f32 %v578, 0.0
    %v653 = vmax.f32 %v583, 0.0
    %v654 = vmax.f32 %v588, 0.0
    %v655 = vmax.f32 %v593, 0.0
    %v656 = vmax.f32 %v598, 0.0
    %v657 = vmax.f32 %v603, 0.0
    %v658 = vmax.f32 %v608, 0.0
    %v659 = vmax.f32 %v613, 0.0
    %v660 = vmax.f32 %v618, 0.0
    %v661 = vmax.f32 %v623, 0.0
    %v662 = vmax.f32 %v628, 0.0
    %v663 = vmax.f32 %v633, 0.0
    %v664 = vmax.f32 %v638, 0.0
    %v665 = vmax.f32 %v643, 0.0
    %v666 = vmax.f32 %v648, 0.0
    %v667 = vld [vmem:[%s5] sm:$0xff]
    %v668 = vld [vmem:[%s6] sm:$0xff]
    %670 = vset.pattern.permute.xlu0 0
    %671 = vperm.xlu0 %670, %v668
    %v672 = vpop.permute.xlu0 %671
    %674 = vmatprep.subr.mxu0 0.0
    %675 = vmatpush1.xpose.msra.mxu0 %v651
    %676 = vmatprep.subr.mxu0 0.0
    %677 = vmatpush1.xpose.msra.mxu0 %v652
    %678 = vmatprep.subr.mxu0 0.0
    %679 = vmatpush1.xpose.msra.mxu0 %v653
    %680 = vmatprep.subr.mxu0 0.0
    %681 = vmatpush1.xpose.msra.mxu0 %v654
    %682 = vmatprep.subr.mxu0 0.0
    %683 = vmatpush1.xpose.msra.mxu0 %v655
    %684 = vmatprep.subr.mxu0 0.0
    %685 = vmatpush1.xpose.msra.mxu0 %v656
    %686 = vmatprep.subr.mxu0 0.0
    %687 = vmatpush1.xpose.msra.mxu0 %v657
    %688 = vmatprep.subr.mxu0 0.0
    %689 = vmatpush1.xpose.msra.mxu0 %v658
    %690 = vmatprep.subr.mxu0 0.0
    %691 = vmatpush1.xpose.msra.mxu0 %v659
    %692 = vmatprep.subr.mxu0 0.0
    %693 = vmatpush1.xpose.msra.mxu0 %v660
    %694 = vmatprep.subr.mxu0 0.0
    %695 = vmatpush1.xpose.msra.mxu0 %v661
    %696 = vmatprep.subr.mxu0 0.0
    %697 = vmatpush1.xpose.msra.mxu0 %v662
    %698 = vmatprep.subr.mxu0 0.0
    %699 = vmatpush1.xpose.msra.mxu0 %v663
    %700 = vmatprep.subr.mxu0 0.0
    %701 = vmatpush1.xpose.msra.mxu0 %v664
    %702 = vmatprep.subr.mxu0 0.0
    %703 = vmatpush1.xpose.msra.mxu0 %v665
    %704 = vmatprep.subr.mxu0 0.0
    %705 = vmatpush1.xpose.msra.mxu0 %v666
    %706 = vmatprep.subr.mxu0 0.0
    %707 = vmatpush1.xpose.msra.mxu0 0.0
    %708 = vmatprep.subr.mxu0 0.0
    %709 = vmatpush1.xpose.msra.mxu0 0.0
    %710 = vmatprep.subr.mxu0 0.0
    %711 = vmatpush1.xpose.msra.mxu0 0.0
    %712 = vmatprep.subr.mxu0 0.0
    %713 = vmatpush1.xpose.msra.mxu0 0.0
    %714 = vmatprep.subr.mxu0 0.0
    %715 = vmatpush1.xpose.msra.mxu0 0.0
    %716 = vmatprep.subr.mxu0 0.0
    %717 = vmatpush1.xpose.msra.mxu0 0.0
    %718 = vmatprep.subr.mxu0 0.0
    %719 = vmatpush1.xpose.msra.mxu0 0.0
    %720 = vmatprep.subr.mxu0 0.0
    %721 = vmatpush1.xpose.msra.mxu0 0.0
    %722 = vmatprep.subr.mxu0 0.0
    %723 = vmatpush1.xpose.msra.mxu0 0.0
    %724 = vmatprep.subr.mxu0 0.0
    %725 = vmatpush1.xpose.msra.mxu0 0.0
    %726 = vmatprep.subr.mxu0 0.0
    %727 = vmatpush1.xpose.msra.mxu0 0.0
    %728 = vmatprep.subr.mxu0 0.0
    %729 = vmatpush1.xpose.msra.mxu0 0.0
    %730 = vmatprep.subr.mxu0 0.0
    %731 = vmatpush1.xpose.msra.mxu0 0.0
    %732 = vmatprep.subr.mxu0 0.0
    %733 = vmatpush1.xpose.msra.mxu0 0.0
    %734 = vmatprep.subr.mxu0 0.0
    %735 = vmatpush1.xpose.msra.mxu0 0.0
    %736 = vmatprep.subr.mxu0 0.0
    %737 = vmatpush1.xpose.msra.mxu0 0.0
    %738 = vmatprep.mubr.f32.mxu0 0.0
    %739 = vmatmul.mubr.f32.gmra.mrb[0].mxu0 %v667
    %v740 = vpop.f32.mrb[0].mxu0
    %v741 = vadd.f32 %v672, %v740
    %v742 = vpop.f32.mrb[0].mxu0
    %743 = vdwg.mxu0
    %744 = vst [vmem:[#allocation2] sm:$0xff] %v741
    // Predicated region
    $region30: #{tpu_custom_call.1} parent=1 // pred_check
      _
    $region31: #{tpu_custom_call.1} parent=1 // pred_check_branch
      %746 = sbr.rel (0) target = $region33
    $region32: #{tpu_custom_call.1} parent=1 // pred_region
      %s748 = ssub.s32 128, 128
      %749 = vsyncadd [#allocation3], %s748
      %s751 = sshll.u32 [#allocation2], 4
      %s752 = int_to_ptr.vmem [resolvable:$true] %s751
      %754 = dma.vmem_to_hbm [thread:$0]  %s752, 128, %s7, [#allocation3]
    $region33: #{tpu_custom_call.1} parent=1 // pred_fallthru
      _
    // Predicated region
    $region34: #{tpu_custom_call.1} parent=1 // pred_check
      _
    $region35: #{tpu_custom_call.1} parent=1 // pred_check_branch
      %756 = sbr.rel (0) target = $region37
    $region36: #{tpu_custom_call.1} parent=1 // pred_region
      %757 = dma.done [#allocation3], 128
    $region37: #{tpu_custom_call.1} parent=1 // pred_fallthru
      _
    %758 = vsyncpa [#allocation3], 1

</llo_original>
